<compile_context>
chip_gen: v7x
topology: tpu7x:2x2x1
jax: 0.10.0
libtpu: 0.0.40
codegen_flags: <defaults>
</compile_context>

<pallas_src>
import functools

import jax
import jax.numpy as jnp
from jax import lax
from jax.experimental import pallas as pl
from jax.experimental.pallas import tpu as pltpu

LANES = 128
SUBLANES = 8
TARGET_BLOCK_ROWS = 1024  # (1024, 128) f32 tile = 512 KiB per input per buffer


def _vae_loss_kernel(
    x_ref, y_ref, mu_ref, ls_ref, w_ref, out_ref, acc_ref,
    *, block_rows, total_rows, needs_mask,
):
    """Grid axis 0 walks row-blocks of the flattened recon tensors (reduction)."""
    i = pl.program_id(0)

    @pl.when(i == 0)
    def _():
        acc_ref[...] = jnp.zeros_like(acc_ref)

    # Hot path: elementwise squared error accumulated into a VMEM vreg accumulator.
    # Upcast inside the kernel (no-op for f32 inputs, halves HBM bytes for bf16).
    d = x_ref[...].astype(jnp.float32) - y_ref[...].astype(jnp.float32)
    sq = d * d
    if needs_mask:
        # Last block may extend past the valid rows (unspecified data) -> mask it.
        row_ids = lax.broadcasted_iota(jnp.int32, sq.shape, 0) + i * block_rows
        sq = jnp.where(row_ids < total_rows, sq, jnp.float32(0.0))
    acc_ref[...] += sq

    @pl.when(i == pl.num_programs(0) - 1)
    def _():
        # Single cross-lane reduce of the accumulator, then the (tiny) KLD term.
        rec = jnp.sum(acc_ref[...])
        mu = mu_ref[...]
        ls = ls_ref[...]
        kld = jnp.float32(-0.5) * jnp.sum(
            jnp.float32(1.0) + ls - mu * mu - jnp.exp(ls)
        )
        out_ref[0, 0] = rec + w_ref[0] * kld


def _recon_slab(v: jnp.ndarray) -> jnp.ndarray:
    """Flatten to (rows, 128) keeping the original dtype.

    For typical NCHW tensors numel % 128 == 0, so this is a free reshape (no copy).
    Only a lane-unaligned tail forces a zero-pad (zeros contribute 0 to the MSE).
    """
    flat = v.reshape(-1)
    rem = flat.size % LANES
    if rem:
        flat = jnp.pad(flat, (0, LANES - rem))
    return flat.reshape(-1, LANES)


def _latent_slab(v: jnp.ndarray) -> jnp.ndarray:
    """Flatten/zero-pad mu/logsigma to an (8k, 128) f32 slab (pad contributes 0 to KLD)."""
    flat = v.reshape(-1).astype(jnp.float32)
    chunk = SUBLANES * LANES
    padded = ((flat.size + chunk - 1) // chunk) * chunk
    flat = jnp.pad(flat, (0, padded - flat.size))
    return flat.reshape(-1, LANES)


def vae_loss(x, y, mu, logsigma, kld_weight: float = 1.0) -> jnp.ndarray:
    xs = _recon_slab(x)
    ys = _recon_slab(y)
    mus = _latent_slab(mu)
    lss = _latent_slab(logsigma)
    w = jnp.asarray([kld_weight], dtype=jnp.float32)

    rows = xs.shape[0]
    if rows <= TARGET_BLOCK_ROWS:
        block_rows = rows            # full dim: always a legal block shape
    else:
        block_rows = TARGET_BLOCK_ROWS  # multiple of 8
    grid_steps = (rows + block_rows - 1) // block_rows
    needs_mask = (rows % block_rows) != 0

    kernel = functools.partial(
        _vae_loss_kernel,
        block_rows=block_rows,
        total_rows=rows,
        needs_mask=needs_mask,
    )

    out = pl.pallas_call(
        kernel,
        out_shape=jax.ShapeDtypeStruct((1, 1), jnp.float32),
        grid_spec=pltpu.PrefetchScalarGridSpec(
            num_scalar_prefetch=0,
            grid=(grid_steps,),
            in_specs=[
                pl.BlockSpec((block_rows, LANES), lambda i: (i, 0)),   # x tile
                pl.BlockSpec((block_rows, LANES), lambda i: (i, 0)),   # y tile
                pl.BlockSpec(mus.shape, lambda i: (0, 0)),             # mu (resident)
                pl.BlockSpec(lss.shape, lambda i: (0, 0)),             # logsigma (resident)
                pl.BlockSpec(memory_space=pltpu.SMEM),                 # kld_weight scalar
            ],
            out_specs=pl.BlockSpec(memory_space=pltpu.SMEM),           # scalar loss
            scratch_shapes=[pltpu.VMEM((block_rows, LANES), jnp.float32)],  # vreg accumulator
        ),
        compiler_params=pltpu.CompilerParams(
            dimension_semantics=("arbitrary",),  # reduction axis
        ),
    )(xs, ys, mus, lss, w)
    return out[0, 0]


def vae_loss_ref(x, y, mu, logsigma, kld_weight: float = 1.0) -> jnp.ndarray:
    rec = jnp.sum((x.astype(jnp.float32) - y.astype(jnp.float32)) ** 2)
    ls = logsigma.astype(jnp.float32)
    m = mu.astype(jnp.float32)
    kld = -0.5 * jnp.sum(1.0 + ls - m * m - jnp.exp(ls))
    return rec + kld_weight * kld


if __name__ == "__main__":
    key = jax.random.PRNGKey(0)
    kx, ky, km, kl = jax.random.split(key, 4)

    # Small shapes consistent with a VAE forward: NCHW images + latent vectors.
    B, C, H, W = 2, 4, 16, 16
    latent = 32

    x = jax.random.normal(kx, (B, C, H, W), dtype=jnp.float32)
    y = jax.random.normal(ky, (B, C, H, W), dtype=jnp.float32)
    mu = jax.random.normal(km, (B, latent), dtype=jnp.float32)
    logsigma = 0.1 * jax.random.normal(kl, (B, latent), dtype=jnp.float32)

    kld_weight = 1.0  # matches VaeLoss(kld_weight=1)

    loss = jax.block_until_ready(vae_loss(x, y, mu, logsigma, kld_weight))
    ref = jax.block_until_ready(vae_loss_ref(x, y, mu, logsigma, kld_weight))

    assert jnp.allclose(loss, ref, rtol=1e-5, atol=1e-4), (loss, ref)
    print("KERNEL_OK")
</pallas_src>

<mosaic_0001>
module attributes {stable_mosaic.version = 11 : i64} {
  func.func @_vae_loss_kernel(%arg0: i32, %arg1: memref<16x128xf32, #tpu.memory_space<vmem>>, %arg2: memref<16x128xf32, #tpu.memory_space<vmem>>, %arg3: memref<8x128xf32, #tpu.memory_space<vmem>>, %arg4: memref<8x128xf32, #tpu.memory_space<vmem>>, %arg5: memref<1xf32, #tpu.memory_space<smem>>, %arg6: memref<1x1xf32, #tpu.memory_space<smem>>, %arg7: memref<16x128xf32, #tpu.memory_space<vmem>>) attributes {dimension_semantics = [#tpu.dimension_semantics<arbitrary>], iteration_bounds = array<i64: 1>, scalar_prefetch = 0 : i64, scratch_operands = 1 : i64, tpu.core_type = #tpu.core_type<tc>, window_params = [{transform_indices = @transform_0, window_bounds = array<i64: 16, 128>}, {transform_indices = @transform_1, window_bounds = array<i64: 16, 128>}, {pipeline_mode = #tpu.pipeline_mode<synchronous>, transform_indices = @transform_2, window_bounds = array<i64: 8, 128>}, {pipeline_mode = #tpu.pipeline_mode<synchronous>, transform_indices = @transform_3, window_bounds = array<i64: 8, 128>}, {transform_indices = @transform_4, window_bounds = array<i64: 1>}, {transform_indices = @transform_5, window_bounds = array<i64: 1, 1>}]} {
    %c0_i32 = arith.constant 0 : i32
    %0 = arith.cmpi eq, %arg0, %c0_i32 : i32
    %1 = arith.extui %0 : i1 to i32
    %c0_i32_0 = arith.constant 0 : i32
    %2 = arith.cmpi ne, %1, %c0_i32_0 : i32
    scf.if %2 {
      %cst = arith.constant 0.000000e+00 : f32
      %13 = vector.broadcast %cst : f32 to vector<16x128xf32>
      %c0_10 = arith.constant 0 : index
      %c0_11 = arith.constant 0 : index
      %14 = vector.load %arg7[%c0_10, %c0_11] : memref<16x128xf32, #tpu.memory_space<vmem>>, vector<16x128xf32>
      tpu.vector_store %arg7[%c0_10, %c0_11], %13 {strides = array<i32>} : memref<16x128xf32, #tpu.memory_space<vmem>>, vector<16x128xf32>,
    } else {
    }
    %c0 = arith.constant 0 : index
    %c0_1 = arith.constant 0 : index
    %3 = vector.load %arg1[%c0, %c0_1] : memref<16x128xf32, #tpu.memory_space<vmem>>, vector<16x128xf32>
    %c0_2 = arith.constant 0 : index
    %c0_3 = arith.constant 0 : index
    %4 = vector.load %arg2[%c0_2, %c0_3] : memref<16x128xf32, #tpu.memory_space<vmem>>, vector<16x128xf32>
    %5 = arith.subf %3, %4 : vector<16x128xf32>
    %6 = arith.mulf %5, %5 : vector<16x128xf32>
    %c0_4 = arith.constant 0 : index
    %c0_5 = arith.constant 0 : index
    %7 = vector.load %arg7[%c0_4, %c0_5] : memref<16x128xf32, #tpu.memory_space<vmem>>, vector<16x128xf32>
    %8 = arith.addf %7, %6 : vector<16x128xf32>
    %c0_6 = arith.constant 0 : index
    %c0_7 = arith.constant 0 : index
    %9 = vector.load %arg7[%c0_6, %c0_7] : memref<16x128xf32, #tpu.memory_space<vmem>>, vector<16x128xf32>
    tpu.vector_store %arg7[%c0_6, %c0_7], %8 {strides = array<i32>} : memref<16x128xf32, #tpu.memory_space<vmem>>, vector<16x128xf32>,
    %c0_i32_8 = arith.constant 0 : i32
    %10 = arith.cmpi eq, %arg0, %c0_i32_8 : i32
    %11 = arith.extui %10 : i1 to i32
    %c0_i32_9 = arith.constant 0 : i32
    %12 = arith.cmpi ne, %11, %c0_i32_9 : i32
    scf.if %12 {
      %c0_10 = arith.constant 0 : index
      %c0_11 = arith.constant 0 : index
      %13 = vector.load %arg7[%c0_10, %c0_11] : memref<16x128xf32, #tpu.memory_space<vmem>>, vector<16x128xf32>
      %14 = vector.shape_cast %13 : vector<16x128xf32> to vector<1x16x128xf32>
      %cst = arith.constant dense<0.000000e+00> : vector<1xf32>
      %15 = vector.multi_reduction <add>, %14, %cst [1, 2] : vector<1x16x128xf32> to vector<1xf32>
      %16 = vector.shape_cast %15 : vector<1xf32> to vector<1x1x1xf32>
      %17 = vector.extract %16[0, 0, 0] : f32 from vector<1x1x1xf32>
      %c0_12 = arith.constant 0 : index
      %c0_13 = arith.constant 0 : index
      %18 = vector.load %arg3[%c0_12, %c0_13] : memref<8x128xf32, #tpu.memory_space<vmem>>, vector<8x128xf32>
      %c0_14 = arith.constant 0 : index
      %c0_15 = arith.constant 0 : index
      %19 = vector.load %arg4[%c0_14, %c0_15] : memref<8x128xf32, #tpu.memory_space<vmem>>, vector<8x128xf32>
      %cst_16 = arith.constant 1.000000e+00 : f32
      %20 = vector.broadcast %cst_16 : f32 to vector<8x128xf32>
      %21 = arith.addf %20, %19 : vector<8x128xf32>
      %22 = arith.mulf %18, %18 : vector<8x128xf32>
      %23 = arith.subf %21, %22 : vector<8x128xf32>
      %24 = math.exp %19 : vector<8x128xf32>
      %25 = arith.subf %23, %24 : vector<8x128xf32>
      %26 = vector.shape_cast %25 : vector<8x128xf32> to vector<1x8x128xf32>
      %cst_17 = arith.constant dense<0.000000e+00> : vector<1xf32>
      %27 = vector.multi_reduction <add>, %26, %cst_17 [1, 2] : vector<1x8x128xf32> to vector<1xf32>
      %28 = vector.shape_cast %27 : vector<1xf32> to vector<1x1x1xf32>
      %29 = vector.extract %28[0, 0, 0] : f32 from vector<1x1x1xf32>
      %cst_18 = arith.constant -5.000000e-01 : f32
      %30 = arith.mulf %cst_18, %29 : f32
      %c0_19 = arith.constant 0 : index
      %31 = memref.load %arg5[%c0_19] : memref<1xf32, #tpu.memory_space<smem>>
      %32 = arith.mulf %31, %30 : f32
      %33 = arith.addf %17, %32 : f32
      %c0_20 = arith.constant 0 : index
      %c0_21 = arith.constant 0 : index
      %34 = memref.load %arg6[%c0_20, %c0_21] : memref<1x1xf32, #tpu.memory_space<smem>>
      memref.store %33, %arg6[%c0_20, %c0_21] : memref<1x1xf32, #tpu.memory_space<smem>>
    } else {
    }
    return
  }
  func.func @transform_0(%arg0: i32) -> (i32, i32) {
    %c0_i32 = arith.constant 0 : i32
    %c0_i32_0 = arith.constant 0 : i32
    return %arg0, %c0_i32 : i32, i32
  }
  func.func @transform_1(%arg0: i32) -> (i32, i32) {
    %c0_i32 = arith.constant 0 : i32
    %c0_i32_0 = arith.constant 0 : i32
    return %arg0, %c0_i32 : i32, i32
  }
  func.func @transform_2(%arg0: i32) -> (i32, i32) {
    %c0_i32 = arith.constant 0 : i32
    %c0_i32_0 = arith.constant 0 : i32
    %c0_i32_1 = arith.constant 0 : i32
    return %c0_i32, %c0_i32_0 : i32, i32
  }
  func.func @transform_3(%arg0: i32) -> (i32, i32) {
    %c0_i32 = arith.constant 0 : i32
    %c0_i32_0 = arith.constant 0 : i32
    %c0_i32_1 = arith.constant 0 : i32
    return %c0_i32, %c0_i32_0 : i32, i32
  }
  func.func @transform_4(%arg0: i32) -> i32 {
    %c0_i32 = arith.constant 0 : i32
    %c0_i32_0 = arith.constant 0 : i32
    return %c0_i32 : i32
  }
  func.func @transform_5(%arg0: i32) -> (i32, i32) {
    %c0_i32 = arith.constant 0 : i32
    %c0_i32_0 = arith.constant 0 : i32
    %c0_i32_1 = arith.constant 0 : i32
    return %c0_i32, %c0_i32_0 : i32, i32
  }
}

</mosaic_0001>

<llo_original>
// kernel: tpu_custom_call.1
$region0: #{tpu_custom_call.1}
  #allocation0 [shape = 'u32[]', space=smem, size = 0x4, offset = 0x4, fixed_abs, tag = 'smem constant byte address 0x4 - core index']
  #allocation1 [shape = 'u32[144,128]{1,0:T(1,128)}', space=vmem, size = 0x12000, scoped, tag = 'internal scratch']
  #allocation2 [shape = 'f32[16,128]{1,0:T(8,128)}', space=vmem, size = 0x2000, scoped, tag = 'scratch operand']
  #allocation3 [shape = 'f32[1]{0:T(128)S(6)}', space=smem, size = 0x200, scoped, tag = 'scoped memory for tpu_custom_call.1']
  %s0 = inlined_call_operand.hbm [shape: f32[16,128], index: 0, kind: input, shape index: {}]
  %s1 = inlined_call_operand.hbm [shape: f32[16,128], index: 1, kind: input, shape index: {}]
  %s2 = inlined_call_operand.vmem [shape: f32[8,128], index: 2, kind: input, shape index: {}]
  %s3 = inlined_call_operand.hbm [shape: f32[8,128], index: 3, kind: input, shape index: {}]
  %s4 = inlined_call_operand.<no memory space> [shape: f32[1], index: 4, kind: input, shape index: {}]
  %s5 = inlined_call_operand.hbm [shape: f32[1,1], index: 5, kind: output, shape index: {}]
  %s6 = sld [smem:[#allocation0]]
  $region50: #{tpu_custom_call.1} parent=0
    _
  %s8 = ssub.s32 1, %s6
  %s9 = scalar_select 0, %s8, %s6
  %10 = sst [smem:[#allocation3]] %s4
  $region1: #{tpu_custom_call.1} parent=0
    #allocation4 [shape = 'u8[8192]{0}', space=vmem, size = 0x2000, scoped, tag = 'input window, operand 0, single buffered']
    #allocation5 [shape = 's32[1]{0}', space=sflag, size = 0x4, scoped, tag = 'scoped memory for tpu_custom_call.1']
    #allocation6 [shape = 's32[1]{0}', space=sflag, size = 0x4, scoped, tag = 'scoped memory for tpu_custom_call.1']
    #allocation7 [shape = 'u8[8192]{0}', space=vmem, size = 0x2000, scoped, tag = 'input window, operand 1, single buffered']
    #allocation8 [shape = 's32[1]{0}', space=sflag, size = 0x4, scoped, tag = 'scoped memory for tpu_custom_call.1']
    #allocation9 [shape = 'u8[4096]{0}', space=vmem, size = 0x1000, scoped, tag = 'input window, operand 3, single buffered']
    #allocation10 [shape = 'u8[512]{0}', space=smem, size = 0x200, scoped, tag = 'output window, operand 0, single buffered']
    %11 = vsyncpa [#allocation5], 0
    %12 = vsyncpa [#allocation8], 0
    %13 = vsyncpa [#allocation6], 0
    // Predicated region
    $region2: #{tpu_custom_call.1} parent=1 // pred_check
      _
    $region3: #{tpu_custom_call.1} parent=1 // pred_check_branch
      %15 = sbr.rel (0) target = $region5
    $region4: #{tpu_custom_call.1} parent=1 // pred_region
      %s17 = ssub.s32 256, 256
      %18 = vsyncadd [#allocation5], %s17
      %s19 = sshll.u32 [#allocation4], 4
      %s20 = int_to_ptr.vmem [resolvable:$true] %s19
      %25 = dma.hbm_to_vmem [thread:$0]  %s0, 256, %s20, [#allocation5], 128, 128, 8
    $region5: #{tpu_custom_call.1} parent=1 // pred_fallthru
      _
    // Predicated region
    $region6: #{tpu_custom_call.1} parent=1 // pred_check
      _
    $region7: #{tpu_custom_call.1} parent=1 // pred_check_branch
      %27 = sbr.rel (0) target = $region9
    $region8: #{tpu_custom_call.1} parent=1 // pred_region
      %s29 = ssub.s32 256, 256
      %30 = vsyncadd [#allocation8], %s29
      %s31 = sshll.u32 [#allocation7], 4
      %s32 = int_to_ptr.vmem [resolvable:$true] %s31
      %37 = dma.hbm_to_vmem [thread:$0]  %s1, 256, %s32, [#allocation8], 128, 128, 8
    $region9: #{tpu_custom_call.1} parent=1 // pred_fallthru
      _
    // Predicated region
    $region10: #{tpu_custom_call.1} parent=1 // pred_check
      _
    $region11: #{tpu_custom_call.1} parent=1 // pred_check_branch
      %39 = sbr.rel (0) target = $region13
    $region12: #{tpu_custom_call.1} parent=1 // pred_region
      _
    $region13: #{tpu_custom_call.1} parent=1 // pred_fallthru
      _
    // Predicated region
    $region14: #{tpu_custom_call.1} parent=1 // pred_check
      _
    $region15: #{tpu_custom_call.1} parent=1 // pred_check_branch
      %41 = sbr.rel (0) target = $region17
    $region16: #{tpu_custom_call.1} parent=1 // pred_region
      %s43 = ssub.s32 128, 128
      %44 = vsyncadd [#allocation8], %s43
      %s46 = sshll.u32 [#allocation9], 4
      %s47 = int_to_ptr.vmem [resolvable:$true] %s46
      %49 = dma.hbm_to_vmem [thread:$0]  %s3, 128, %s47, [#allocation8]
    $region17: #{tpu_custom_call.1} parent=1 // pred_fallthru
      _
    // Predicated region
    $region18: #{tpu_custom_call.1} parent=1 // pred_check
      _
    $region19: #{tpu_custom_call.1} parent=1 // pred_check_branch
      %51 = sbr.rel (0) target = $region21
    $region20: #{tpu_custom_call.1} parent=1 // pred_region
      _
    $region21: #{tpu_custom_call.1} parent=1 // pred_fallthru
      _
    // Predicated region
    $region22: #{tpu_custom_call.1} parent=1 // pred_check
      _
    $region23: #{tpu_custom_call.1} parent=1 // pred_check_branch
      %53 = sbr.rel (0) target = $region25
    $region24: #{tpu_custom_call.1} parent=1 // pred_region
      %54 = dma.done [#allocation5], 256
    $region25: #{tpu_custom_call.1} parent=1 // pred_fallthru
      _
    // Predicated region
    $region26: #{tpu_custom_call.1} parent=1 // pred_check
      _
    $region27: #{tpu_custom_call.1} parent=1 // pred_check_branch
      %56 = sbr.rel (0) target = $region29
    $region28: #{tpu_custom_call.1} parent=1 // pred_region
      %57 = dma.done [#allocation8], 256
    $region29: #{tpu_custom_call.1} parent=1 // pred_fallthru
      _
    // Predicated region
    $region30: #{tpu_custom_call.1} parent=1 // pred_check
      _
    $region31: #{tpu_custom_call.1} parent=1 // pred_check_branch
      %59 = sbr.rel (0) target = $region33
    $region32: #{tpu_custom_call.1} parent=1 // pred_region
      %60 = dma.done [#allocation8], 128
    $region33: #{tpu_custom_call.1} parent=1 // pred_fallthru
      _
    %p61 = scmp.eq.s32.totalorder 0, 0
    // Predicated region
    $region34: #{tpu_custom_call.1} parent=1 // pred_check
      %p62 = pneg %p61
    $region35: #{tpu_custom_call.1} parent=1 // pred_check_branch
      %64 = sbr.rel (%p62) target = $region37
    $region36: #{tpu_custom_call.1} parent=1 // pred_region
      %65 = vst [vmem:[#allocation2] sm:$0xff] 0.0
      %66 = vst [vmem:[#allocation2 + $0x8] sm:$0xff] 0.0
    $region37: #{tpu_custom_call.1} parent=1 // pred_fallthru
      _
    %v67 = vld [vmem:[#allocation4] sm:$0xff]
    %v68 = vld [vmem:[#allocation4 + $0x8] sm:$0xff]
    %v69 = vld [vmem:[#allocation7] sm:$0xff]
    %v70 = vld [vmem:[#allocation7 + $0x8] sm:$0xff]
    %v71 = vsub.f32 %v67, %v69
    %v72 = vsub.f32 %v68, %v70
    %v73 = vmul.f32 %v71, %v71
    %v74 = vmul.f32 %v72, %v72
    %v75 = vld [vmem:[#allocation2] sm:$0xff]
    %v76 = vld [vmem:[#allocation2 + $0x8] sm:$0xff]
    %v77 = vadd.f32 %v75, %v73
    %v78 = vadd.f32 %v76, %v74
    %79 = vst [vmem:[#allocation2] sm:$0xff] %v77
    %80 = vst [vmem:[#allocation2 + $0x8] sm:$0xff] %v78
    // Predicated region
    $region38: #{tpu_custom_call.1} parent=1 // pred_check
      %p81 = pneg %p61
    $region39: #{tpu_custom_call.1} parent=1 // pred_check_branch
      %83 = sbr.rel (%p81) target = $region41
    $region40: #{tpu_custom_call.1} parent=1 // pred_region
      %v84 = vld [vmem:[#allocation2] sm:$0xff]
      %v85 = vld [vmem:[#allocation2 + $0x8] sm:$0xff]
      %v86 = vadd.f32 %v84, %v85
      %87 = vadd.xlane.f32.xlu0 %v86
      %v88 = vpop.xlane.xlu0 %87
      %v89 = vrot.slane %v88, 4
      %v90 = vadd.f32 %v88, %v89
      %v91 = vrot.slane %v90, 2
      %v92 = vadd.f32 %v90, %v91
      %v93 = vrot.slane %v92, 1
      %v94 = vadd.f32 %v92, %v93
      %s95 = vtos %v94
      %v96 = vld [vmem:[%s2] sm:$0xff]
      %v97 = vld [vmem:[#allocation9] sm:$0xff]
      %v98 = vadd.f32 %v97, 1.0
      %v99 = vmul.f32 %v96, %v96
      %v100 = vsub.f32 %v98, %v99
      %v101 = vmul.f32 %v97, 1.442695
      %v102 = vpow.pop %v101
      %v103 = vsub.f32 %v100, %v102
      %104 = vadd.xlane.f32.xlu0 %v103
      %v105 = vpop.xlane.xlu0 %104
      %v106 = vrot.slane %v105, 4
      %v107 = vadd.f32 %v105, %v106
      %v108 = vrot.slane %v107, 2
      %v109 = vadd.f32 %v107, %v108
      %v110 = vrot.slane %v109, 1
      %v111 = vadd.f32 %v109, %v110
      %s112 = vtos %v111
      %s113 = smul.f32 %s112, -0.5
      %s114 = sld [smem:[#allocation3]]
      %s115 = smul.f32 %s114, %s113
      %s116 = sadd.f32 %s95, %s115
      %s117 = scalar_lea.smem [#allocation10], 0
      %118 = sst [smem:[%s117]] %s116
    $region41: #{tpu_custom_call.1} parent=1 // pred_fallthru
      _
    // Predicated region
    $region42: #{tpu_custom_call.1} parent=1 // pred_check
      _
    $region43: #{tpu_custom_call.1} parent=1 // pred_check_branch
      %120 = sbr.rel (0) target = $region45
    $region44: #{tpu_custom_call.1} parent=1 // pred_region
      %s122 = ssub.s32 16, 16
      %123 = vsyncadd [#allocation6], %s122
      %126 = dma.smem_to_hbm [#allocation10], 16, %s5, [#allocation6]
    $region45: #{tpu_custom_call.1} parent=1 // pred_fallthru
      _
    // Predicated region
    $region46: #{tpu_custom_call.1} parent=1 // pred_check
      _
    $region47: #{tpu_custom_call.1} parent=1 // pred_check_branch
      %128 = sbr.rel (0) target = $region49
    $region48: #{tpu_custom_call.1} parent=1 // pred_region
      %129 = dma.done [#allocation6], 16
    $region49: #{tpu_custom_call.1} parent=1 // pred_fallthru
      _
    %130 = sfence
    %131 = vsyncpa [#allocation5], 1
    %132 = vsyncpa [#allocation8], 1
    %133 = vsyncpa [#allocation6], 1

</llo_original>
